<compile_context>
chip_gen: v5e
topology: v5e:2x2
jax: 0.10.0
libtpu: 0.0.40
codegen_flags: <defaults>
</compile_context>

<pallas_src>
import functools

import jax
import jax.numpy as jnp
from jax.experimental import pallas as pl
from jax.experimental.pallas import tpu as pltpu


# ------------------------------------------------------------------ kernel --

def _make_silu_kernel(compute_dtype):
    def kernel(x_ref, o_ref):
        x = x_ref[...].astype(compute_dtype)
        # SiLU via tanh: x * sigmoid(x) == 0.5 * x * (1 + tanh(x/2)).
        # tanh rides the EUP slot; remaining muls/adds are cheap VPU work.
        y = (0.5 * x) * (1.0 + jnp.tanh(0.5 * x))
        o_ref[...] = y.astype(o_ref.dtype)
    return kernel


# ---------------------------------------------------------------- wrapper ---

_LANE = 128
_SUBLANE = 8
_MAX_LANE = 512                      # lane width cap (elements)
_MAX_BLOCK_BYTES = 4 * 1024 * 1024   # per-buffer cap: safe for v7x 64 MiB VMEM
_MAX_BLOCK_ROWS = 1024               # ~85% HBM roofline regime for elementwise


def _compute_dtype_for(dtype):
    """bf16-native compute on v6e/v7x; f32 everywhere else / for f32 inputs."""
    if dtype == jnp.float32:
        return jnp.float32
    if dtype == jnp.bfloat16:
        try:
            kind = jax.devices()[0].device_kind.lower()
        except Exception:  # pragma: no cover - conservative fallback
            kind = ""
        if "v5" in kind:   # v5e: no bf16 VPU/EUP -> compute f32, store bf16
            return jnp.float32
        return jnp.bfloat16
    return jnp.float32


def _pick_slab(total):
    """(rows, lane): rows multiple of 8 first, then maximize lane (mult of 128)."""
    padded = pl.cdiv(total, _SUBLANE * _LANE) * (_SUBLANE * _LANE)
    lane = _LANE
    while (lane * 2 <= _MAX_LANE
           and padded % (lane * 2) == 0
           and (padded // (lane * 2)) % _SUBLANE == 0):
        lane *= 2
    rows = padded // lane
    return padded, rows, lane


def _pick_block_rows(rows, lane, itemsize):
    """Largest multiple-of-8 divisor of rows under the VMEM / 1024-row caps."""
    cap = min(_MAX_BLOCK_ROWS, _MAX_BLOCK_BYTES // max(1, lane * itemsize))
    cap = max(_SUBLANE, (cap // _SUBLANE) * _SUBLANE)
    m = rows // _SUBLANE                      # rows is a multiple of 8
    best = 1
    for d in range(min(m, cap // _SUBLANE), 0, -1):
        if m % d == 0:
            best = d
            break
    return _SUBLANE * best


def lambda_silu(x, *, force_pallas=False):
    """Pallas implementation of Lambda(lambda x: x * sigmoid(x))."""
    orig_shape = x.shape
    orig_dtype = x.dtype
    total = x.size

    # Tiny inputs are pure launch overhead; let XLA fuse them instead.
    if not force_pallas and total * x.dtype.itemsize < 64 * 1024:
        return (x.astype(jnp.float32) * jax.nn.sigmoid(x.astype(jnp.float32))
                ).astype(orig_dtype)

    compute_dtype = _compute_dtype_for(orig_dtype)

    padded_total, rows, lane = _pick_slab(total)
    flat = x.reshape(-1)
    if padded_total != total:
        flat = jnp.pad(flat, (0, padded_total - total))
    x2d = flat.reshape(rows, lane)

    block_rows = _pick_block_rows(rows, lane, jnp.dtype(orig_dtype).itemsize)
    grid = (rows // block_rows,)

    out2d = pl.pallas_call(
        _make_silu_kernel(compute_dtype),
        out_shape=jax.ShapeDtypeStruct((rows, lane), orig_dtype),
        grid=grid,
        in_specs=[pl.BlockSpec((block_rows, lane), lambda i: (i, 0))],
        out_specs=pl.BlockSpec((block_rows, lane), lambda i: (i, 0)),
        compiler_params=pltpu.CompilerParams(
            dimension_semantics=("parallel",),
        ),
    )(x2d)

    out_flat = out2d.reshape(-1)
    if padded_total != total:
        out_flat = out_flat[:total]
    return out_flat.reshape(orig_shape)


# ------------------------------------------------------------------- test ---

if __name__ == "__main__":
    key = jax.random.PRNGKey(0)
    # NCHW input, small shape consistent with a conv-style feature map.
    x = jax.random.normal(key, (2, 4, 16, 16), dtype=jnp.float32)

    run = jax.jit(functools.partial(lambda_silu, force_pallas=True))
    out = jax.block_until_ready(run(x))

    # Reference (same semantics as torch: x * sigmoid(x)).
    ref = x * jax.nn.sigmoid(x)
    assert out.shape == x.shape and out.dtype == x.dtype
    assert jnp.max(jnp.abs(out - ref)) < 1e-5

    print("KERNEL_OK")
</pallas_src>

<mosaic_0001>
module attributes {stable_mosaic.version = 11 : i64} {
  func.func @kernel(%arg0: i32, %arg1: memref<8x256xf32, #tpu.memory_space<vmem>>, %arg2: memref<8x256xf32, #tpu.memory_space<vmem>>) attributes {dimension_semantics = [#tpu.dimension_semantics<parallel>], iteration_bounds = array<i64: 1>, scalar_prefetch = 0 : i64, scratch_operands = 0 : i64, tpu.core_type = #tpu.core_type<tc>, window_params = [{transform_indices = @transform_0, window_bounds = array<i64: 8, 256>}, {transform_indices = @transform_1, window_bounds = array<i64: 8, 256>}]} {
    %c0 = arith.constant 0 : index
    %c0_0 = arith.constant 0 : index
    %0 = vector.load %arg1[%c0, %c0_0] : memref<8x256xf32, #tpu.memory_space<vmem>>, vector<8x256xf32>
    %cst = arith.constant 5.000000e-01 : f32
    %1 = vector.broadcast %cst : f32 to vector<8x256xf32>
    %2 = arith.mulf %1, %0 : vector<8x256xf32>
    %cst_1 = arith.constant 5.000000e-01 : f32
    %3 = vector.broadcast %cst_1 : f32 to vector<8x256xf32>
    %4 = arith.mulf %3, %0 : vector<8x256xf32>
    %5 = math.tanh %4 : vector<8x256xf32>
    %cst_2 = arith.constant 1.000000e+00 : f32
    %6 = vector.broadcast %cst_2 : f32 to vector<8x256xf32>
    %7 = arith.addf %6, %5 : vector<8x256xf32>
    %8 = arith.mulf %2, %7 : vector<8x256xf32>
    %c0_3 = arith.constant 0 : index
    %c0_4 = arith.constant 0 : index
    %9 = vector.load %arg2[%c0_3, %c0_4] : memref<8x256xf32, #tpu.memory_space<vmem>>, vector<8x256xf32>
    tpu.vector_store %arg2[%c0_3, %c0_4], %8 {strides = array<i32>} : memref<8x256xf32, #tpu.memory_space<vmem>>, vector<8x256xf32>,
    return
  }
  func.func @transform_0(%arg0: i32) -> (i32, i32) {
    %c0_i32 = arith.constant 0 : i32
    %c0_i32_0 = arith.constant 0 : i32
    return %arg0, %c0_i32 : i32, i32
  }
  func.func @transform_1(%arg0: i32) -> (i32, i32) {
    %c0_i32 = arith.constant 0 : i32
    %c0_i32_0 = arith.constant 0 : i32
    return %arg0, %c0_i32 : i32, i32
  }
}

</mosaic_0001>

<llo_original>
// kernel: lambda_silu.1
$region0: #{lambda_silu.1}
  #allocation0 [shape = 'u32[]', space=smem, size = 0x4, offset = 0x4, fixed_abs, tag = 'smem constant byte address 0x4 - core index']
  #allocation1 [shape = 'u32[72,128]{1,0:T(1,128)}', space=vmem, size = 0x9000, scoped, tag = 'internal scratch']
  %s0 = inlined_call_operand.vmem [shape: f32[8,256], index: 0, kind: input, shape index: {}]
  %s1 = inlined_call_operand.vmem [shape: f32[8,256], index: 1, kind: output, shape index: {}]
  %s2 = sld [smem:[#allocation0]]
  $region14: #{lambda_silu.1} parent=0
    _
  %s4 = ssub.s32 1, %s2
  %s5 = scalar_select 0, %s4, %s2
  // Predicated region
  $region2: #{lambda_silu.1} parent=0 // pred_check
    _
  $region3: #{lambda_silu.1} parent=0 // pred_check_branch
    %7 = sbr.rel (0) target = $region5
  $region4: #{lambda_silu.1} parent=0 // pred_region
    _
  $region5: #{lambda_silu.1} parent=0 // pred_fallthru
    _
  %v8 = vld [vmem:[%s0] sm:$0xff]
  %v9 = vld [vmem:[%s0 + $0x8] sm:$0xff]
  %v10 = vmul.f32 %v8, 0.5
  %v11 = vmul.f32 %v9, 0.5
  %v12 = vtanh.pop %v10
  %v13 = vtanh.pop %v11
  %v14 = vadd.f32 %v12, 1.0
  %v15 = vadd.f32 %v13, 1.0
  %v16 = vmul.f32 %v10, %v14
  %v17 = vmul.f32 %v11, %v15
  %18 = vst [vmem:[%s1] sm:$0xff] %v16
  %19 = vst [vmem:[%s1 + $0x8] sm:$0xff] %v17
  // Predicated region
  $region6: #{lambda_silu.1} parent=0 // pred_check
    _
  $region7: #{lambda_silu.1} parent=0 // pred_check_branch
    %21 = sbr.rel (0) target = $region9
  $region8: #{lambda_silu.1} parent=0 // pred_region
    _
  $region9: #{lambda_silu.1} parent=0 // pred_fallthru
    _
  // Predicated region
  $region10: #{lambda_silu.1} parent=0 // pred_check
    _
  $region11: #{lambda_silu.1} parent=0 // pred_check_branch
    %23 = sbr.rel (0) target = $region13
  $region12: #{lambda_silu.1} parent=0 // pred_region
    _
  $region13: #{lambda_silu.1} parent=0 // pred_fallthru
    _

</llo_original>
